<compile_context>
chip_gen: v5e
topology: v5e:2x2
jax: 0.10.0
libtpu: 0.0.40
codegen_flags: <defaults>
</compile_context>

<pallas_src>
import jax
import jax.numpy as jnp
from jax.experimental import pallas as pl
from jax.experimental.pallas import tpu as pltpu

LANE = 128
_HIGHEST = jax.lax.Precision.HIGHEST


def _round_up(v, m):
    return ((v + m - 1) // m) * m


# ------------------------------ kernel helpers ---------------------------------
def _softmax_over_t(scores_bt):
    """Numerically-stable softmax over the sequence axis (axis 1) of (B, T)."""
    s = scores_bt - jnp.max(scores_bt, axis=1, keepdims=True)
    p = jnp.exp(s)
    return p / jnp.sum(p, axis=1, keepdims=True)


def _pool_and_store(Mb, alpha_bt, out_ref):
    """attn_pool[b] = sum_t alpha[b,t] * Mb[b,t,:].  Pack (pool | alpha) into the
    lane-dense slab with two static sliced stores (no lane-axis concatenate)."""
    B, T, Dm = Mb.shape
    pool = jnp.sum(alpha_bt[:, :, None] * Mb, axis=1)            # (B, Dm)
    out_ref[:, :Dm] = pool
    out_ref[:, Dm:Dm + T] = alpha_bt


# ------------------------------ fused kernels -----------------------------------
def _dot_kernel(m_ref, x_ref, out_ref):
    # att_type='dot': alpha = softmax_t(x . M_t)
    Mb = m_ref[...]                                              # (B, T, Dm)
    x = x_ref[...]                                               # (B, Dm)
    scores = jnp.sum(Mb * x[:, None, :], axis=2)                 # (B, T)
    _pool_and_store(Mb, _softmax_over_t(scores), out_ref)


def _general_kernel(m_ref, x_ref, w_ref, out_ref):
    # att_type='general': x -> x @ W (no bias) on the MXU, then dot attention.
    Mb = m_ref[...]                                              # (B, T, Dm)
    xw = jnp.dot(x_ref[...], w_ref[...],
                 precision=_HIGHEST, preferred_element_type=jnp.float32)  # (B, Dm)
    scores = jnp.sum(Mb * xw[:, None, :], axis=2)                # (B, T)
    _pool_and_store(Mb, _softmax_over_t(scores), out_ref)


def _general2_kernel(m_ref, x_ref, mask_ref, w_ref, b_ref, out_ref):
    # att_type='general2': masked scores, tanh, softmax, mask-renorm.
    # (mask is binary, so masking M and the scores is equivalent to masking the
    #  scores only — the M-side multiply is dropped.)
    Mb = m_ref[...]                                              # (B, T, Dm)
    mask = mask_ref[...]                                         # (B, T)
    xw = jnp.dot(x_ref[...], w_ref[...],
                 precision=_HIGHEST, preferred_element_type=jnp.float32) + b_ref[...]
    scores = jnp.tanh(jnp.sum(Mb * xw[:, None, :], axis=2) * mask)   # (B, T)
    alpha = _softmax_over_t(scores) * mask
    denom = jnp.maximum(jnp.sum(alpha, axis=1, keepdims=True), 1e-10)  # all-masked guard
    _pool_and_store(Mb, alpha / denom, out_ref)


def _concat_kernel(m_ref, x_ref, w1m_ref, w1x_ref, w2_ref, out_ref):
    # att_type='concat': tanh(W1 @ [M_t ; x]) -> vector_prod -> softmax over seq.
    Mb = m_ref[...]                                              # (B, T, Dm)
    B, T, Dm = Mb.shape
    base_x = jnp.dot(x_ref[...], w1x_ref[...],
                     precision=_HIGHEST, preferred_element_type=jnp.float32)   # (B, A)
    base_m = jnp.dot(Mb.reshape(B * T, Dm), w1m_ref[...],
                     precision=_HIGHEST, preferred_element_type=jnp.float32)   # (B*T, A)
    mx = jnp.tanh(base_m.reshape(B, T, -1) + base_x[:, None, :])                # (B, T, A)
    scores = jnp.sum(mx * w2_ref[...][None, :, :], axis=2)       # (B, T)
    _pool_and_store(Mb, _softmax_over_t(scores), out_ref)


# --------------------------------- wrappers --------------------------------------
def _batched_impl(params, M_all, x_all, mask_all, att_type):
    """Batched forward: N independent MatchingAttention calls in one gridded launch.

    M_all: (N, seq_len, batch, mem_dim); x_all: (N, batch, cand_dim);
    mask_all: (N, batch, seq_len) or None.
    Returns attn_pool (N, batch, mem_dim) and alpha (N, batch, 1, seq_len).
    """
    N, T, B, Dm = M_all.shape
    Dc = x_all.shape[-1]
    W = _round_up(Dm + T, LANE)                      # lane-dense output slab width
    Mb_all = jnp.transpose(M_all, (0, 2, 1, 3))      # (N, B, T, Dm) — wrapper-side plumbing

    m_spec = pl.BlockSpec((None, B, T, Dm), lambda i: (i, 0, 0, 0))
    x_spec = pl.BlockSpec((None, B, Dc), lambda i: (i, 0, 0))
    out_spec = pl.BlockSpec((None, B, W), lambda i: (i, 0, 0))

    def const_spec(arr):  # weights stay resident: constant block index across grid
        zeros = (0,) * arr.ndim
        return pl.BlockSpec(arr.shape, lambda i, _z=zeros: _z)

    if att_type == "dot":
        kernel = _dot_kernel
        inputs = (Mb_all, x_all)
        in_specs = [m_spec, x_spec]
    elif att_type == "general":
        kernel = _general_kernel
        inputs = (Mb_all, x_all, params["general_w"])
        in_specs = [m_spec, x_spec, const_spec(params["general_w"])]
    elif att_type == "general2":
        if mask_all is None:
            mask_all = jnp.ones((N, B, T), dtype=M_all.dtype)
        kernel = _general2_kernel
        inputs = (Mb_all, x_all, mask_all, params["general2_w"], params["general2_b"])
        in_specs = [m_spec, x_spec,
                    pl.BlockSpec((None, B, T), lambda i: (i, 0, 0)),
                    const_spec(params["general2_w"]),
                    const_spec(params["general2_b"])]
    elif att_type == "concat":
        kernel = _concat_kernel
        inputs = (Mb_all, x_all, params["concat_w1_m"], params["concat_w1_x"],
                  params["concat_w2"])
        in_specs = [m_spec, x_spec,
                    const_spec(params["concat_w1_m"]),
                    const_spec(params["concat_w1_x"]),
                    const_spec(params["concat_w2"])]
    else:
        raise ValueError(f"unknown att_type {att_type!r}")

    slab = pl.pallas_call(
        kernel,
        out_shape=jax.ShapeDtypeStruct((N, B, W), jnp.float32),
        grid=(N,),
        in_specs=in_specs,
        out_specs=out_spec,
        compiler_params=pltpu.CompilerParams(
            dimension_semantics=("parallel",)),      # both TCs on v7x; no-op on v5e/v6e
    )(*inputs)

    attn_pool = slab[:, :, :Dm]                      # (N, B, mem_dim)
    alpha = slab[:, :, Dm:Dm + T][:, :, None, :]     # (N, B, 1, seq_len)
    return attn_pool, alpha


def _single_impl(params, M, x, mask, att_type):
    """Single-instance forward matching the PyTorch module one-to-one."""
    mask_all = None if mask is None else mask[None]
    pool, alpha = _batched_impl(params, M[None], x[None], mask_all, att_type)
    return pool[0], alpha[0]


matching_attention = jax.jit(_single_impl, static_argnames=("att_type",))
matching_attention_batched = jax.jit(_batched_impl, static_argnames=("att_type",))


# ----------------------------- pure-JAX reference --------------------------------
def matching_attention_ref(params, M, x, mask=None, att_type="general"):
    """Mirror of the PyTorch forward (HIGHEST-precision einsums) for verification."""
    T, B, Dm = M.shape
    hp = "highest"
    Mb = jnp.transpose(M, (1, 0, 2))                                 # (B, T, Dm)
    if mask is None:
        mask = jnp.ones((B, T), dtype=M.dtype)
    if att_type == "dot":
        scores = jnp.einsum("bd,btd->bt", x, Mb, precision=hp)
        alpha = jax.nn.softmax(scores, axis=1)
    elif att_type == "general":
        xw = jnp.einsum("bc,cm->bm", x, params["general_w"], precision=hp)
        scores = jnp.einsum("bm,btm->bt", xw, Mb, precision=hp)
        alpha = jax.nn.softmax(scores, axis=1)
    elif att_type == "general2":
        xw = (jnp.einsum("bc,cm->bm", x, params["general2_w"], precision=hp)
              + params["general2_b"][0])
        scores = jnp.einsum("bm,btm->bt", xw, Mb * mask[:, :, None], precision=hp) * mask
        scores = jnp.tanh(scores)
        a = jax.nn.softmax(scores, axis=1) * mask
        alpha = a / jnp.sum(a, axis=1, keepdims=True)
    else:  # concat
        Dc = x.shape[1]
        x_exp = jnp.broadcast_to(x[:, None, :], (B, T, Dc))
        Mx = jnp.concatenate([Mb, x_exp], axis=2)
        W1 = jnp.concatenate([params["concat_w1_m"], params["concat_w1_x"]], axis=0)
        mx_a = jnp.tanh(jnp.einsum("btk,ka->bta", Mx, W1, precision=hp))
        scores = jnp.einsum("bta,a->bt", mx_a, params["concat_w2"][0], precision=hp)
        alpha = jax.nn.softmax(scores, axis=1)
    pool = jnp.einsum("bt,btm->bm", alpha, Mb, precision=hp)
    return pool, alpha[:, None, :]


def _check(a, b, tol=2e-3):
    assert a.shape == b.shape, (a.shape, b.shape)
    err = float(jnp.max(jnp.abs(a - b)))
    assert err < tol, f"max abs err {err}"


# ------------------------------------ main ----------------------------------------
if __name__ == "__main__":
    SEQ_LEN, BATCH = 8, 2
    MEM_DIM, CAND_DIM, ALPHA_DIM = 32, 32, 32

    key = jax.random.PRNGKey(0)
    kM, kx, k1, k2, k3, k4, k5, k6, kMb, kxb = jax.random.split(key, 10)
    M = jax.random.normal(kM, (SEQ_LEN, BATCH, MEM_DIM), dtype=jnp.float32)
    x = jax.random.normal(kx, (BATCH, CAND_DIM), dtype=jnp.float32)
    lengths = jnp.asarray([8, 6])
    umask = (jnp.arange(SEQ_LEN)[None, :] < lengths[:, None]).astype(jnp.float32)  # (B, T)

    scale = 0.1
    params = {
        "general_w":   scale * jax.random.normal(k1, (CAND_DIM, MEM_DIM), jnp.float32),
        "general2_w":  scale * jax.random.normal(k2, (CAND_DIM, MEM_DIM), jnp.float32),
        "general2_b":  scale * jax.random.normal(k3, (1, MEM_DIM), jnp.float32),
        "concat_w1_m": scale * jax.random.normal(k4, (MEM_DIM, ALPHA_DIM), jnp.float32),
        "concat_w1_x": scale * jax.random.normal(k5, (CAND_DIM, ALPHA_DIM), jnp.float32),
        "concat_w2":   scale * jax.random.normal(k6, (1, ALPHA_DIM), jnp.float32),
    }

    # 1) Single-instance path (matches the PyTorch forward one-to-one).
    #    Primary path in baseline_meld: att_type='general2' with an utterance mask.
    pool, alpha = matching_attention(params, M, x, umask, att_type="general2")
    jax.block_until_ready(pool)
    jax.block_until_ready(alpha)
    assert pool.shape == (BATCH, MEM_DIM) and alpha.shape == (BATCH, 1, SEQ_LEN)
    pool_r, alpha_r = matching_attention_ref(params, M, x, umask, att_type="general2")
    _check(pool, pool_r)
    _check(alpha, alpha_r)

    for at in ("dot", "general", "concat"):
        p_k, a_k = matching_attention(params, M, x, None, att_type=at)
        jax.block_until_ready(p_k)
        p_r, a_r = matching_attention_ref(params, M, x, None, att_type=at)
        _check(p_k, p_r)
        _check(a_k, a_r)

    # 2) Batched/gridded path: N independent attention calls in ONE pallas_call
    #    (grid over the instance axis, parallel dimension semantics).
    N = 4
    M_all = jax.random.normal(kMb, (N, SEQ_LEN, BATCH, MEM_DIM), dtype=jnp.float32)
    x_all = jax.random.normal(kxb, (N, BATCH, CAND_DIM), dtype=jnp.float32)
    mask_all = jnp.broadcast_to(umask, (N, BATCH, SEQ_LEN))
    pool_b, alpha_b = matching_attention_batched(params, M_all, x_all, mask_all,
                                                 att_type="general2")
    jax.block_until_ready(pool_b)
    for n in range(N):
        p_r, a_r = matching_attention_ref(params, M_all[n], x_all[n], mask_all[n],
                                          att_type="general2")
        _check(pool_b[n], p_r)
        _check(alpha_b[n], a_r)

    print("KERNEL_OK")
</pallas_src>

<mosaic_0001>
module attributes {stable_mosaic.version = 11 : i64} {
  func.func @_general2_kernel(%arg0: i32, %arg1: memref<1x2x8x32xf32, #tpu.memory_space<vmem>>, %arg2: memref<1x2x32xf32, #tpu.memory_space<vmem>>, %arg3: memref<1x2x8xf32, #tpu.memory_space<vmem>>, %arg4: memref<32x32xf32, #tpu.memory_space<vmem>>, %arg5: memref<1x32xf32, #tpu.memory_space<vmem>>, %arg6: memref<1x2x128xf32, #tpu.memory_space<vmem>>) attributes {dimension_semantics = [#tpu.dimension_semantics<parallel>], iteration_bounds = array<i64: 1>, scalar_prefetch = 0 : i64, scratch_operands = 0 : i64, tpu.core_type = #tpu.core_type<tc>, window_params = [{transform_indices = @transform_0, window_bounds = array<i64: 1, 2, 8, 32>}, {transform_indices = @transform_1, window_bounds = array<i64: 1, 2, 32>}, {transform_indices = @transform_2, window_bounds = array<i64: 1, 2, 8>}, {pipeline_mode = #tpu.pipeline_mode<synchronous>, transform_indices = @transform_3, window_bounds = array<i64: 32, 32>}, {pipeline_mode = #tpu.pipeline_mode<synchronous>, transform_indices = @transform_4, window_bounds = array<i64: 1, 32>}, {transform_indices = @transform_5, window_bounds = array<i64: 1, 2, 128>}]} {
    %c0 = arith.constant 0 : index
    %c0_0 = arith.constant 0 : index
    %c0_1 = arith.constant 0 : index
    %c0_2 = arith.constant 0 : index
    %0 = vector.load %arg1[%c0, %c0_0, %c0_1, %c0_2] : memref<1x2x8x32xf32, #tpu.memory_space<vmem>>, vector<1x2x8x32xf32>
    %1 = vector.shape_cast %0 : vector<1x2x8x32xf32> to vector<2x8x32xf32>
    %c0_3 = arith.constant 0 : index
    %c0_4 = arith.constant 0 : index
    %c0_5 = arith.constant 0 : index
    %2 = vector.load %arg3[%c0_3, %c0_4, %c0_5] : memref<1x2x8xf32, #tpu.memory_space<vmem>>, vector<1x2x8xf32>
    %3 = vector.shape_cast %2 : vector<1x2x8xf32> to vector<2x8xf32>
    %c0_6 = arith.constant 0 : index
    %c0_7 = arith.constant 0 : index
    %c0_8 = arith.constant 0 : index
    %4 = vector.load %arg2[%c0_6, %c0_7, %c0_8] : memref<1x2x32xf32, #tpu.memory_space<vmem>>, vector<1x2x32xf32>
    %5 = vector.shape_cast %4 : vector<1x2x32xf32> to vector<2x32xf32>
    %c0_9 = arith.constant 0 : index
    %c0_10 = arith.constant 0 : index
    %6 = vector.load %arg4[%c0_9, %c0_10] : memref<32x32xf32, #tpu.memory_space<vmem>>, vector<32x32xf32>
    %cst = arith.constant dense<0.000000e+00> : vector<2x32xf32>
    %7 = tpu.matmul %5, %6, %cst {dimension_numbers = #tpu.dot_dimension_numbers<[1], [0], [0], [1], [0, 0, 1, 1], [], []>, precision = #tpu.contract_precision<fp32>} : vector<2x32xf32>, vector<32x32xf32>, vector<2x32xf32> -> vector<2x32xf32>
    %c0_11 = arith.constant 0 : index
    %c0_12 = arith.constant 0 : index
    %8 = vector.load %arg5[%c0_11, %c0_12] : memref<1x32xf32, #tpu.memory_space<vmem>>, vector<1x32xf32>
    %9 = vector.broadcast %8 : vector<1x32xf32> to vector<2x32xf32>
    %10 = arith.addf %7, %9 : vector<2x32xf32>
    %11 = vector.shape_cast %10 : vector<2x32xf32> to vector<2x1x32xf32>
    %12 = vector.broadcast %11 : vector<2x1x32xf32> to vector<2x8x32xf32>
    %13 = arith.mulf %1, %12 : vector<2x8x32xf32>
    %cst_13 = arith.constant dense<0.000000e+00> : vector<2x8xf32>
    %14 = vector.multi_reduction <add>, %13, %cst_13 [2] : vector<2x8x32xf32> to vector<2x8xf32>
    %15 = arith.mulf %14, %3 : vector<2x8xf32>
    %16 = math.tanh %15 : vector<2x8xf32>
    %cst_14 = arith.constant dense<0xFF800000> : vector<2xf32>
    %17 = vector.multi_reduction <maximumf>, %16, %cst_14 [1] : vector<2x8xf32> to vector<2xf32>
    %18 = vector.shape_cast %17 : vector<2xf32> to vector<2x1xf32>
    %19 = vector.broadcast %18 : vector<2x1xf32> to vector<2x8xf32>
    %20 = arith.subf %16, %19 : vector<2x8xf32>
    %21 = math.exp %20 : vector<2x8xf32>
    %cst_15 = arith.constant dense<0.000000e+00> : vector<2xf32>
    %22 = vector.multi_reduction <add>, %21, %cst_15 [1] : vector<2x8xf32> to vector<2xf32>
    %23 = vector.shape_cast %22 : vector<2xf32> to vector<2x1xf32>
    %24 = vector.broadcast %23 : vector<2x1xf32> to vector<2x8xf32>
    %25 = arith.divf %21, %24 : vector<2x8xf32>
    %26 = arith.mulf %25, %3 : vector<2x8xf32>
    %cst_16 = arith.constant dense<0.000000e+00> : vector<2xf32>
    %27 = vector.multi_reduction <add>, %26, %cst_16 [1] : vector<2x8xf32> to vector<2xf32>
    %28 = vector.shape_cast %27 : vector<2xf32> to vector<2x1xf32>
    %cst_17 = arith.constant 1.000000e-10 : f32
    %29 = vector.broadcast %cst_17 : f32 to vector<2x1xf32>
    %30 = arith.maximumf %28, %29 : vector<2x1xf32>
    %31 = vector.broadcast %30 : vector<2x1xf32> to vector<2x8xf32>
    %32 = arith.divf %26, %31 : vector<2x8xf32>
    %33 = vector.shape_cast %32 : vector<2x8xf32> to vector<2x8x1xf32>
    %34 = vector.broadcast %33 : vector<2x8x1xf32> to vector<2x8x32xf32>
    %35 = arith.mulf %34, %1 : vector<2x8x32xf32>
    %cst_18 = arith.constant dense<0.000000e+00> : vector<2x32xf32>
    %36 = vector.multi_reduction <add>, %35, %cst_18 [1] : vector<2x8x32xf32> to vector<2x32xf32>
    %c0_19 = arith.constant 0 : index
    %c0_20 = arith.constant 0 : index
    %c0_21 = arith.constant 0 : index
    %37 = vector.load %arg6[%c0_19, %c0_20, %c0_21] : memref<1x2x128xf32, #tpu.memory_space<vmem>>, vector<1x2x32xf32>
    %38 = vector.shape_cast %37 : vector<1x2x32xf32> to vector<2x32xf32>
    %39 = vector.shape_cast %36 : vector<2x32xf32> to vector<1x2x32xf32>
    tpu.vector_store %arg6[%c0_19, %c0_20, %c0_21], %39 {strides = array<i32>} : memref<1x2x128xf32, #tpu.memory_space<vmem>>, vector<1x2x32xf32>,
    %c0_22 = arith.constant 0 : index
    %c0_23 = arith.constant 0 : index
    %c32 = arith.constant 32 : index
    %40 = vector.load %arg6[%c0_22, %c0_23, %c32] : memref<1x2x128xf32, #tpu.memory_space<vmem>>, vector<1x2x8xf32>
    %41 = vector.shape_cast %40 : vector<1x2x8xf32> to vector<2x8xf32>
    %42 = vector.shape_cast %32 : vector<2x8xf32> to vector<1x2x8xf32>
    tpu.vector_store %arg6[%c0_22, %c0_23, %c32], %42 {strides = array<i32>} : memref<1x2x128xf32, #tpu.memory_space<vmem>>, vector<1x2x8xf32>,
    return
  }
  func.func @transform_0(%arg0: i32) -> (i32, i32, i32, i32) {
    %c0_i32 = arith.constant 0 : i32
    %c0_i32_0 = arith.constant 0 : i32
    %c0_i32_1 = arith.constant 0 : i32
    %c0_i32_2 = arith.constant 0 : i32
    return %arg0, %c0_i32, %c0_i32_0, %c0_i32_1 : i32, i32, i32, i32
  }
  func.func @transform_1(%arg0: i32) -> (i32, i32, i32) {
    %c0_i32 = arith.constant 0 : i32
    %c0_i32_0 = arith.constant 0 : i32
    %c0_i32_1 = arith.constant 0 : i32
    return %arg0, %c0_i32, %c0_i32_0 : i32, i32, i32
  }
  func.func @transform_2(%arg0: i32) -> (i32, i32, i32) {
    %c0_i32 = arith.constant 0 : i32
    %c0_i32_0 = arith.constant 0 : i32
    %c0_i32_1 = arith.constant 0 : i32
    return %arg0, %c0_i32, %c0_i32_0 : i32, i32, i32
  }
  func.func @transform_3(%arg0: i32) -> (i32, i32) {
    %c0_i32 = arith.constant 0 : i32
    %c0_i32_0 = arith.constant 0 : i32
    %c0_i32_1 = arith.constant 0 : i32
    return %c0_i32, %c0_i32_0 : i32, i32
  }
  func.func @transform_4(%arg0: i32) -> (i32, i32) {
    %c0_i32 = arith.constant 0 : i32
    %c0_i32_0 = arith.constant 0 : i32
    %c0_i32_1 = arith.constant 0 : i32
    return %c0_i32, %c0_i32_0 : i32, i32
  }
  func.func @transform_5(%arg0: i32) -> (i32, i32, i32) {
    %c0_i32 = arith.constant 0 : i32
    %c0_i32_0 = arith.constant 0 : i32
    %c0_i32_1 = arith.constant 0 : i32
    return %arg0, %c0_i32, %c0_i32_0 : i32, i32, i32
  }
}

</mosaic_0001>

<llo_original>
// kernel: _single_impl.1
$region0: #{_single_impl.1}
  #allocation0 [shape = 'u32[]', space=smem, size = 0x4, offset = 0x4, fixed_abs, tag = 'smem constant byte address 0x4 - core index']
  #allocation1 [shape = 'u32[72,128]{1,0:T(1,128)}', space=vmem, size = 0x9000, scoped, tag = 'internal scratch']
  %s0 = inlined_call_operand.vmem [shape: f32[1,2,8,32], index: 0, kind: input, shape index: {}]
  %s1 = inlined_call_operand.vmem [shape: f32[1,2,32], index: 1, kind: input, shape index: {}]
  %s2 = inlined_call_operand.vmem [shape: f32[1,2,8], index: 2, kind: input, shape index: {}]
  %s3 = inlined_call_operand.vmem [shape: f32[32,32], index: 3, kind: input, shape index: {}]
  %s4 = inlined_call_operand.hbm [shape: f32[1,32], index: 4, kind: input, shape index: {}]
  %s5 = inlined_call_operand.vmem [shape: f32[1,2,128], index: 5, kind: output, shape index: {}]
  %s6 = sld [smem:[#allocation0]]
  $region34: #{_single_impl.1} parent=0
    _
  %s8 = ssub.s32 1, %s6
  %s9 = scalar_select 0, %s8, %s6
  $region1: #{_single_impl.1} parent=0
    #allocation2 [shape = 'u8[512]{0}', space=vmem, size = 0x400, scoped, tag = 'input window, operand 4, single buffered']
    #allocation3 [shape = 's32[1]{0}', space=sflag, size = 0x4, scoped, tag = 'scoped memory for _single_impl.1']
    %10 = vsyncpa [#allocation3], 0
    // Predicated region
    $region2: #{_single_impl.1} parent=1 // pred_check
      _
    $region3: #{_single_impl.1} parent=1 // pred_check_branch
      %12 = sbr.rel (0) target = $region5
    $region4: #{_single_impl.1} parent=1 // pred_region
      _
    $region5: #{_single_impl.1} parent=1 // pred_fallthru
      _
    // Predicated region
    $region6: #{_single_impl.1} parent=1 // pred_check
      _
    $region7: #{_single_impl.1} parent=1 // pred_check_branch
      %14 = sbr.rel (0) target = $region9
    $region8: #{_single_impl.1} parent=1 // pred_region
      _
    $region9: #{_single_impl.1} parent=1 // pred_fallthru
      _
    // Predicated region
    $region10: #{_single_impl.1} parent=1 // pred_check
      _
    $region11: #{_single_impl.1} parent=1 // pred_check_branch
      %16 = sbr.rel (0) target = $region13
    $region12: #{_single_impl.1} parent=1 // pred_region
      _
    $region13: #{_single_impl.1} parent=1 // pred_fallthru
      _
    // Predicated region
    $region14: #{_single_impl.1} parent=1 // pred_check
      _
    $region15: #{_single_impl.1} parent=1 // pred_check_branch
      %18 = sbr.rel (0) target = $region17
    $region16: #{_single_impl.1} parent=1 // pred_region
      _
    $region17: #{_single_impl.1} parent=1 // pred_fallthru
      _
    // Predicated region
    $region18: #{_single_impl.1} parent=1 // pred_check
      _
    $region19: #{_single_impl.1} parent=1 // pred_check_branch
      %20 = sbr.rel (0) target = $region21
    $region20: #{_single_impl.1} parent=1 // pred_region
      %22 = vsyncadd [#allocation3], 0
      %s24 = sshll.u32 %s4, 4
      %s25 = int_to_ptr.hbm [resolvable:$true] %s24
      %s26 = sshll.u32 [#allocation2], 4
      %s27 = int_to_ptr.vmem [resolvable:$true] %s26
      %29 = dma.hbm_to_vmem [thread:$0]  %s25, 16, %s27, [#allocation3]
    $region21: #{_single_impl.1} parent=1 // pred_fallthru
      _
    // Predicated region
    $region22: #{_single_impl.1} parent=1 // pred_check
      _
    $region23: #{_single_impl.1} parent=1 // pred_check_branch
      %31 = sbr.rel (0) target = $region25
    $region24: #{_single_impl.1} parent=1 // pred_region
      %33 = dma.done [#allocation3], 16
    $region25: #{_single_impl.1} parent=1 // pred_fallthru
      _
    %v34 = vld [vmem:[%s0] sm:$0xff]
    %v35 = vld [vmem:[%s0 + $0x8] sm:$0xff]
    %v36 = vld [vmem:[%s2] sm:$0x3]
    %v37 = vld [vmem:[%s1] sm:$0x3]
    %v38 = vld [vmem:[%s3] sm:$0xff]
    %v39 = vld [vmem:[%s3 + $0x8] sm:$0xff]
    %v40 = vld [vmem:[%s3 + $0x10] sm:$0xff]
    %v41 = vld [vmem:[%s3 + $0x18] sm:$0xff]
    %v42 = vld [vmem:[#allocation2] sm:$0x1]
    %v44 = vperm.slane %v42, 0
    %vm46 = vcmask 261120
    %v48 = vsel %vm46, %v37, 0
    %50 = vmatpush.msra.mxu0 0.0
    %51 = vmatpush.msra.mxu0 0.0
    %52 = vmatpush.msra.mxu0 0.0
    %53 = vmatpush.msra.mxu0 0.0
    %54 = vmatpush.msra.mxu0 0.0
    %55 = vmatpush.msra.mxu0 0.0
    %56 = vmatpush.msra.mxu0 0.0
    %57 = vmatpush.msra.mxu0 0.0
    %58 = vmatpush.msra.mxu0 0.0
    %59 = vmatpush.msra.mxu0 0.0
    %60 = vmatpush.msra.mxu0 0.0
    %61 = vmatpush.msra.mxu0 0.0
    %v62 = vand.u32 %v41, 4294901760
    %63 = vmatpush.msra.mxu0 %v62
    %v64 = vand.u32 %v40, 4294901760
    %65 = vmatpush.msra.mxu0 %v64
    %v66 = vand.u32 %v39, 4294901760
    %67 = vmatpush.msra.mxu0 %v66
    %v68 = vand.u32 %v38, 4294901760
    %69 = vmatpush.msra.mxu0 %v68
    %v70 = vand.u32 %v48, 4294901760
    %v71 = vsub.f32 %v48, %v70
    %v72 = vand.u32 %v71, 4294901760
    %v73 = vsub.f32 %v71, %v72
    %v74 = vand.u32 %v73, 4294901760
    %75 = vmatmul.f32.gmra.mxu0 %v74
    %v76 = vpop.f32.mrf.mxu0
    %v77 = vadd.f32 %v44, %v76
    %78 = vdwg.mxu0
    %79 = vmatpush.msra.mxu0 0.0
    %80 = vmatpush.msra.mxu0 0.0
    %81 = vmatpush.msra.mxu0 0.0
    %82 = vmatpush.msra.mxu0 0.0
    %83 = vmatpush.msra.mxu0 0.0
    %84 = vmatpush.msra.mxu0 0.0
    %85 = vmatpush.msra.mxu0 0.0
    %86 = vmatpush.msra.mxu0 0.0
    %87 = vmatpush.msra.mxu0 0.0
    %88 = vmatpush.msra.mxu0 0.0
    %89 = vmatpush.msra.mxu0 0.0
    %90 = vmatpush.msra.mxu0 0.0
    %v91 = vand.u32 %v41, 4294901760
    %v92 = vsub.f32 %v41, %v91
    %v93 = vand.u32 %v92, 4294901760
    %v94 = vsub.f32 %v92, %v93
    %v95 = vand.u32 %v94, 4294901760
    %96 = vmatpush.msra.mxu0 %v95
    %v97 = vand.u32 %v40, 4294901760
    %v98 = vsub.f32 %v40, %v97
    %v99 = vand.u32 %v98, 4294901760
    %v100 = vsub.f32 %v98, %v99
    %v101 = vand.u32 %v100, 4294901760
    %102 = vmatpush.msra.mxu0 %v101
    %v103 = vand.u32 %v39, 4294901760
    %v104 = vsub.f32 %v39, %v103
    %v105 = vand.u32 %v104, 4294901760
    %v106 = vsub.f32 %v104, %v105
    %v107 = vand.u32 %v106, 4294901760
    %108 = vmatpush.msra.mxu0 %v107
    %v109 = vand.u32 %v38, 4294901760
    %v110 = vsub.f32 %v38, %v109
    %v111 = vand.u32 %v110, 4294901760
    %v112 = vsub.f32 %v110, %v111
    %v113 = vand.u32 %v112, 4294901760
    %114 = vmatpush.msra.mxu0 %v113
    %v115 = vand.u32 %v48, 4294901760
    %116 = vmatmul.f32.gmra.mxu0 %v115
    %v117 = vpop.f32.mrf.mxu0
    %v118 = vadd.f32 %v77, %v117
    %119 = vdwg.mxu0
    %120 = vmatpush.msra.mxu0 0.0
    %121 = vmatpush.msra.mxu0 0.0
    %122 = vmatpush.msra.mxu0 0.0
    %123 = vmatpush.msra.mxu0 0.0
    %124 = vmatpush.msra.mxu0 0.0
    %125 = vmatpush.msra.mxu0 0.0
    %126 = vmatpush.msra.mxu0 0.0
    %127 = vmatpush.msra.mxu0 0.0
    %128 = vmatpush.msra.mxu0 0.0
    %129 = vmatpush.msra.mxu0 0.0
    %130 = vmatpush.msra.mxu0 0.0
    %131 = vmatpush.msra.mxu0 0.0
    %v132 = vand.u32 %v41, 4294901760
    %v133 = vsub.f32 %v41, %v132
    %134 = vmatpush.msra.mxu0 %v133
    %v135 = vand.u32 %v40, 4294901760
    %v136 = vsub.f32 %v40, %v135
    %137 = vmatpush.msra.mxu0 %v136
    %v138 = vand.u32 %v39, 4294901760
    %v139 = vsub.f32 %v39, %v138
    %140 = vmatpush.msra.mxu0 %v139
    %v141 = vand.u32 %v38, 4294901760
    %v142 = vsub.f32 %v38, %v141
    %143 = vmatpush.msra.mxu0 %v142
    %v144 = vand.u32 %v48, 4294901760
    %v145 = vsub.f32 %v48, %v144
    %146 = vmatmul.f32.gmra.mxu0 %v145
    %v147 = vpop.f32.mrf.mxu0
    %v148 = vadd.f32 %v118, %v147
    %149 = vdwg.mxu0
    %150 = vmatpush.msra.mxu0 0.0
    %151 = vmatpush.msra.mxu0 0.0
    %152 = vmatpush.msra.mxu0 0.0
    %153 = vmatpush.msra.mxu0 0.0
    %154 = vmatpush.msra.mxu0 0.0
    %155 = vmatpush.msra.mxu0 0.0
    %156 = vmatpush.msra.mxu0 0.0
    %157 = vmatpush.msra.mxu0 0.0
    %158 = vmatpush.msra.mxu0 0.0
    %159 = vmatpush.msra.mxu0 0.0
    %160 = vmatpush.msra.mxu0 0.0
    %161 = vmatpush.msra.mxu0 0.0
    %v162 = vand.u32 %v41, 4294901760
    %163 = vmatpush.msra.mxu0 %v162
    %v164 = vand.u32 %v40, 4294901760
    %165 = vmatpush.msra.mxu0 %v164
    %v166 = vand.u32 %v39, 4294901760
    %167 = vmatpush.msra.mxu0 %v166
    %v168 = vand.u32 %v38, 4294901760
    %169 = vmatpush.msra.mxu0 %v168
    %v170 = vand.u32 %v48, 4294901760
    %v171 = vsub.f32 %v48, %v170
    %v172 = vand.u32 %v171, 4294901760
    %173 = vmatmul.f32.gmra.mxu0 %v172
    %v174 = vpop.f32.mrf.mxu0
    %v175 = vadd.f32 %v148, %v174
    %176 = vdwg.mxu0
    %177 = vmatpush.msra.mxu0 0.0
    %178 = vmatpush.msra.mxu0 0.0
    %179 = vmatpush.msra.mxu0 0.0
    %180 = vmatpush.msra.mxu0 0.0
    %181 = vmatpush.msra.mxu0 0.0
    %182 = vmatpush.msra.mxu0 0.0
    %183 = vmatpush.msra.mxu0 0.0
    %184 = vmatpush.msra.mxu0 0.0
    %185 = vmatpush.msra.mxu0 0.0
    %186 = vmatpush.msra.mxu0 0.0
    %187 = vmatpush.msra.mxu0 0.0
    %188 = vmatpush.msra.mxu0 0.0
    %v189 = vand.u32 %v41, 4294901760
    %v190 = vsub.f32 %v41, %v189
    %v191 = vand.u32 %v190, 4294901760
    %192 = vmatpush.msra.mxu0 %v191
    %v193 = vand.u32 %v40, 4294901760
    %v194 = vsub.f32 %v40, %v193
    %v195 = vand.u32 %v194, 4294901760
    %196 = vmatpush.msra.mxu0 %v195
    %v197 = vand.u32 %v39, 4294901760
    %v198 = vsub.f32 %v39, %v197
    %v199 = vand.u32 %v198, 4294901760
    %200 = vmatpush.msra.mxu0 %v199
    %v201 = vand.u32 %v38, 4294901760
    %v202 = vsub.f32 %v38, %v201
    %v203 = vand.u32 %v202, 4294901760
    %204 = vmatpush.msra.mxu0 %v203
    %v205 = vand.u32 %v48, 4294901760
    %206 = vmatmul.f32.gmra.mxu0 %v205
    %v207 = vpop.f32.mrf.mxu0
    %v208 = vadd.f32 %v175, %v207
    %209 = vdwg.mxu0
    %210 = vmatpush.msra.mxu0 0.0
    %211 = vmatpush.msra.mxu0 0.0
    %212 = vmatpush.msra.mxu0 0.0
    %213 = vmatpush.msra.mxu0 0.0
    %214 = vmatpush.msra.mxu0 0.0
    %215 = vmatpush.msra.mxu0 0.0
    %216 = vmatpush.msra.mxu0 0.0
    %217 = vmatpush.msra.mxu0 0.0
    %218 = vmatpush.msra.mxu0 0.0
    %219 = vmatpush.msra.mxu0 0.0
    %220 = vmatpush.msra.mxu0 0.0
    %221 = vmatpush.msra.mxu0 0.0
    %v222 = vand.u32 %v41, 4294901760
    %223 = vmatpush.msra.mxu0 %v222
    %v224 = vand.u32 %v40, 4294901760
    %225 = vmatpush.msra.mxu0 %v224
    %v226 = vand.u32 %v39, 4294901760
    %227 = vmatpush.msra.mxu0 %v226
    %v228 = vand.u32 %v38, 4294901760
    %229 = vmatpush.msra.mxu0 %v228
    %v230 = vand.u32 %v48, 4294901760
    %231 = vmatmul.f32.gmra.mxu0 %v230
    %v232 = vpop.f32.mrf.mxu0
    %v233 = vadd.f32 %v208, %v232
    %234 = vdwg.mxu0
    %v236 = vrot.slane %v233, 1
    %v237 = vperm.slane %v233, 0
    %v238 = vperm.slane %v236, 0
    %v241 = vmul.f32 %v34, %v237
    %v242 = vmul.f32 %v35, %v238
    %v243 = vsel %vm46, %v241, 0.0
    %244 = vadd.xlane.f32.xlu0 %v243
    %v245 = vpop.xlane.xlu0 %244
    %v246 = vsel %vm46, %v242, 0.0
    %247 = vadd.xlane.f32.xlu0 %v246
    %v248 = vpop.xlane.xlu0 %247
    %v250 = vperm.slane %v36, 0
    %v251 = vlaneseq
    %v252 = vshrl.u32 %v251, 7
    %254 = vset.pattern.permute.xlu0 %v252
    %255 = vperm.xlu0 %254, %v250
    %v256 = vpop.permute.xlu0 %255
    %v257 = vperm.slane %v36, 1
    %v258 = vlaneseq
    %v259 = vshrl.u32 %v258, 7
    %261 = vset.pattern.permute.xlu0 %v259
    %262 = vperm.xlu0 %261, %v257
    %v263 = vpop.permute.xlu0 %262
    %v266 = vmul.f32 %v245, %v256
    %v267 = vmul.f32 %v248, %v263
    %v268 = vtanh.pop %v266
    %v269 = vtanh.pop %v267
    %272 = vset.pattern.permute.xlu0 0
    %273 = vperm.xlu0 %272, %v268
    %v274 = vpop.permute.xlu0 %273
    %275 = vset.pattern.permute.xlu0 0
    %276 = vperm.xlu0 %275, %v269
    %v277 = vpop.permute.xlu0 %276
    %v278 = vlaneseq
    %v279 = vand.u32 %v278, 127
    %v280 = vperm.slane %v274, %v279
    %v281 = vperm.slane %v277, %v279
    %vm282 = vcmask 1041409
    %v283 = vsel %vm282, %v281, %v280
    %vm285 = vcmask 58368
    %v286 = vsel %vm285, %v283, -inf
    %287 = vmax.xlane.f32.xlu0 %v286
    %v288 = vpop.xlane.xlu0 %287
    %v290 = vperm.slane %v288, 0
    %v291 = vperm.slane %v288, 1
    %v294 = vsub.f32 %v268, %v290
    %v295 = vsub.f32 %v269, %v291
    %v296 = vmul.f32 %v294, 1.442695
    %v297 = vpow.pop %v296
    %v298 = vmul.f32 %v295, 1.442695
    %v299 = vpow.pop %v298
    %302 = vset.pattern.permute.xlu0 0
    %303 = vperm.xlu0 %302, %v297
    %v304 = vpop.permute.xlu0 %303
    %305 = vset.pattern.permute.xlu0 0
    %306 = vperm.xlu0 %305, %v299
    %v307 = vpop.permute.xlu0 %306
    %v308 = vperm.slane %v304, %v279
    %v309 = vperm.slane %v307, %v279
    %v310 = vsel %vm282, %v309, %v308
    %v312 = vsel %vm285, %v310, 0.0
    %313 = vadd.xlane.f32.xlu0 %v312
    %v314 = vpop.xlane.xlu0 %313
    %v316 = vperm.slane %v314, 0
    %v317 = vperm.slane %v314, 1
    %v320 = vrcp.pop %v316
    %v321 = vmul.f32 %v316, %v320
    %v322 = vsub.f32 1.0, %v321
    %v323 = vmul.f32 %v320, %v322
    %v324 = vadd.f32 %v320, %v323
    %vm325 = vweird.f32 %v316
    %vm326 = vweird.f32 %v320
    %vm327 = vmor %vm325, %vm326
    %v328 = vsel %vm327, %v320, %v324
    %v329 = vand.u32 2147483647, %v316
    %vm330 = vcmp.eq.f32.partialorder %v329, 8.507059e+37
    %v331 = vand.u32 %v316, 2147483648
    %v332 = vor.u32 1.1754944e-38, %v331
    %v333 = vsel %vm330, %v332, %v328
    %v334 = vmul.f32 %v297, %v333
    %v335 = vrcp.pop %v317
    %v336 = vmul.f32 %v317, %v335
    %v337 = vsub.f32 1.0, %v336
    %v338 = vmul.f32 %v335, %v337
    %v339 = vadd.f32 %v335, %v338
    %vm340 = vweird.f32 %v317
    %vm341 = vweird.f32 %v335
    %vm342 = vmor %vm340, %vm341
    %v343 = vsel %vm342, %v335, %v339
    %v344 = vand.u32 2147483647, %v317
    %vm345 = vcmp.eq.f32.partialorder %v344, 8.507059e+37
    %v346 = vand.u32 %v317, 2147483648
    %v347 = vor.u32 1.1754944e-38, %v346
    %v348 = vsel %vm345, %v347, %v343
    %v349 = vmul.f32 %v299, %v348
    %v350 = vmul.f32 %v334, %v256
    %v351 = vmul.f32 %v349, %v263
    %354 = vset.pattern.permute.xlu0 0
    %355 = vperm.xlu0 %354, %v350
    %v356 = vpop.permute.xlu0 %355
    %357 = vset.pattern.permute.xlu0 0
    %358 = vperm.xlu0 %357, %v351
    %v359 = vpop.permute.xlu0 %358
    %v360 = vperm.slane %v356, %v279
    %v361 = vperm.slane %v359, %v279
    %v362 = vsel %vm282, %v361, %v360
    %v364 = vsel %vm285, %v362, 0.0
    %365 = vadd.xlane.f32.xlu0 %v364
    %v366 = vpop.xlane.xlu0 %365
    %v367 = vmax.f32 %v366, 1e-10
    %v369 = vperm.slane %v367, 0
    %v370 = vperm.slane %v367, 1
    %v373 = vrcp.pop %v369
    %v374 = vmul.f32 %v369, %v373
    %v375 = vsub.f32 1.0, %v374
    %v376 = vmul.f32 %v373, %v375
    %v377 = vadd.f32 %v373, %v376
    %vm378 = vweird.f32 %v369
    %vm379 = vweird.f32 %v373
    %vm380 = vmor %vm378, %vm379
    %v381 = vsel %vm380, %v373, %v377
    %v382 = vand.u32 2147483647, %v369
    %vm383 = vcmp.eq.f32.partialorder %v382, 8.507059e+37
    %v384 = vand.u32 %v369, 2147483648
    %v385 = vor.u32 1.1754944e-38, %v384
    %v386 = vsel %vm383, %v385, %v381
    %v387 = vmul.f32 %v350, %v386
    %v388 = vrcp.pop %v370
    %v389 = vmul.f32 %v370, %v388
    %v390 = vsub.f32 1.0, %v389
    %v391 = vmul.f32 %v388, %v390
    %v392 = vadd.f32 %v388, %v391
    %vm393 = vweird.f32 %v370
    %vm394 = vweird.f32 %v388
    %vm395 = vmor %vm393, %vm394
    %v396 = vsel %vm395, %v388, %v392
    %v397 = vand.u32 2147483647, %v370
    %vm398 = vcmp.eq.f32.partialorder %v397, 8.507059e+37
    %v399 = vand.u32 %v370, 2147483648
    %v400 = vor.u32 1.1754944e-38, %v399
    %v401 = vsel %vm398, %v400, %v396
    %v402 = vmul.f32 %v351, %v401
    %404 = vset.pattern.permute.xlu0 0
    %405 = vperm.xlu0 %404, %v387
    %v406 = vpop.permute.xlu0 %405
    %409 = vset.pattern.permute.xlu0 0
    %410 = vperm.xlu0 %409, %v402
    %v411 = vpop.permute.xlu0 %410
    %v413 = vmul.f32 %v406, %v34
    %v414 = vmul.f32 %v411, %v35
    %v415 = vsel %vm46, %v413, 0.0
    %v416 = vrot.slane %v415, 4
    %v417 = vadd.f32 %v415, %v416
    %v418 = vrot.slane %v417, 2
    %v419 = vadd.f32 %v417, %v418
    %v420 = vrot.slane %v419, 1
    %v421 = vadd.f32 %v419, %v420
    %v422 = vsel %vm46, %v414, 0.0
    %v423 = vrot.slane %v422, 4
    %v424 = vadd.f32 %v422, %v423
    %v425 = vrot.slane %v424, 2
    %v426 = vadd.f32 %v424, %v425
    %v427 = vrot.slane %v426, 1
    %v428 = vadd.f32 %v426, %v427
    %v431 = vsel %vm282, %v428, %v421
    %vm433 = vcmask 254976
    %434 = vst.msk [vmem:[%s5] sm:$0x3] %vm433, %v431
    %v435 = vadd.s32 %v279, 4294967264
    %v436 = vperm.slane %v406, %v435
    %v437 = vperm.slane %v411, %v435
    %v438 = vsel %vm282, %v437, %v436
    %vm440 = vcmask 320768
    %441 = vst.msk [vmem:[%s5] sm:$0x3] %vm440, %v438
    // Predicated region
    $region26: #{_single_impl.1} parent=1 // pred_check
      _
    $region27: #{_single_impl.1} parent=1 // pred_check_branch
      %443 = sbr.rel (0) target = $region29
    $region28: #{_single_impl.1} parent=1 // pred_region
      _
    $region29: #{_single_impl.1} parent=1 // pred_fallthru
      _
    // Predicated region
    $region30: #{_single_impl.1} parent=1 // pred_check
      _
    $region31: #{_single_impl.1} parent=1 // pred_check_branch
      %445 = sbr.rel (0) target = $region33
    $region32: #{_single_impl.1} parent=1 // pred_region
      _
    $region33: #{_single_impl.1} parent=1 // pred_fallthru
      _
    %446 = vsyncpa [#allocation3], 1

</llo_original>
